<compile_context>
chip_gen: v6e
topology: v6e:2x2x1
jax: 0.10.0
libtpu: 0.0.40
codegen_flags: <defaults>
</compile_context>

<pallas_src>
import jax
import jax.numpy as jnp
from jax.experimental import pallas as pl
from jax.experimental.pallas import tpu as pltpu


def _round_up(x, m):
    return (x + m - 1) // m * m


def _make_kernel(TB, S_pad, V_pad, n_valid_tokens, n_out):
    inv_len = 1.0 / float(n_valid_tokens)
    NEG = -1e30  # mask value for padded logit lanes (avoids inf arithmetic)

    def kernel(ids_ref,                          # VMEM (TB*S_pad, 1) int32
               emb_ref,                          # VMEM (V_pad, D_pad) f32 (resident)
               w1_ref, b1_ref, w2_ref, b2_ref,   # VMEM weight blocks (resident)
               out_ref):                         # VMEM (TB, O_pad) f32
        # ---- embedding lookup + mean as a counts-matrix matmul ----
        ids = ids_ref[...]                                           # (TB*S_pad, 1)
        viota = jax.lax.broadcasted_iota(jnp.int32, (TB * S_pad, V_pad), 1)
        onehot = (ids == viota).astype(jnp.float32)                  # (TB*S_pad, V_pad)
        # Pad ids are == V_pad, so they never match -> contribute zero rows.
        counts = jnp.sum(onehot.reshape(TB, S_pad, V_pad), axis=1)   # (TB, V_pad)
        mean = jnp.dot(counts, emb_ref[...],
                       preferred_element_type=jnp.float32) * inv_len  # (TB, D_pad)

        # ---- MLP head ----
        h = jnp.dot(mean, w1_ref[...],
                    preferred_element_type=jnp.float32) + b1_ref[...]
        h = jnp.maximum(h, 0.0)                                       # ReLU
        o = jnp.dot(h, w2_ref[...],
                    preferred_element_type=jnp.float32) + b2_ref[...]
        o = jnp.maximum(o, 0.0)                                       # ReLU

        # Mask padded logit lanes so they don't corrupt the normalizer.
        col = jax.lax.broadcasted_iota(jnp.int32, o.shape, 1)
        o = jnp.where(col < n_out, o, NEG)

        # LogSoftmax(dim=1); lane-dense (TB, O_pad) store.
        m = jnp.max(o, axis=1, keepdims=True)
        lse = jnp.log(jnp.sum(jnp.exp(o - m), axis=1, keepdims=True)) + m
        out_ref[...] = o - lse

    return kernel


def dan2_forward(token_ids, emb_table, w1, b1, w2, b2, *, batch_tile=128):
    """token_ids: (B, S) int; returns (B, 2) float32 log-probs."""
    B, S = token_ids.shape
    V, D = emb_table.shape
    H = w1.shape[1]
    O = w2.shape[1]

    # ---- static tiling / padding decisions ----
    S_pad = _round_up(S, 8)
    V_pad = _round_up(V, 128)
    D_pad = _round_up(D, 128)
    H_pad = _round_up(H, 128)
    O_pad = _round_up(O, 128)

    b8 = _round_up(B, 8)
    TB = min(batch_tile, b8)
    # Keep at least 2 batch tiles when the batch allows it, so the "parallel"
    # grid axis can shard across v7x's two TensorCores (no-op on v5e/v6e).
    if TB == b8 and TB >= 16:
        TB = _round_up(TB // 2, 8)
    # Keep the per-step one-hot workspace bounded (<= ~8 MiB).
    while TB > 8 and TB * S_pad * V_pad * 4 > (8 << 20):
        TB = _round_up(TB // 2, 8)
    B_pad = _round_up(B, TB)
    nb = B_pad // TB
    PAD_ID = V_pad  # never matches the vocab iota -> zero contribution

    f32 = jnp.float32
    # One-time host-side weight prep: zero-pad to MXU/lane aligned shapes.
    # TODO(synk): for large vocab / embedding dims, cast emb/w1/w2 to bf16 to
    # halve VMEM; kept f32 here to preserve the PyTorch module's numerics.
    emb_pad = jnp.zeros((V_pad, D_pad), f32).at[:V, :D].set(emb_table.astype(f32))
    w1_pad = jnp.zeros((D_pad, H_pad), f32).at[:D, :H].set(w1.astype(f32))
    b1_pad = jnp.zeros((1, H_pad), f32).at[0, :H].set(b1.astype(f32))
    w2_pad = jnp.zeros((H_pad, O_pad), f32).at[:H, :O].set(w2.astype(f32))
    b2_pad = jnp.zeros((1, O_pad), f32).at[0, :O].set(b2.astype(f32))

    # Token ids: pad extra batch rows / tail sequence positions with PAD_ID,
    # flatten to a column so the kernel can lane-broadcast against a vocab iota.
    ids = jnp.full((B_pad, S_pad), PAD_ID, jnp.int32)
    ids = ids.at[:B, :S].set(token_ids.astype(jnp.int32))
    ids_col = ids.reshape(B_pad * S_pad, 1)

    kernel = _make_kernel(TB, S_pad, V_pad, S, O)

    cost = pl.CostEstimate(
        flops=2 * B_pad * (V_pad * D_pad + D_pad * H_pad + H_pad * O_pad)
              + B_pad * S_pad * V_pad,
        transcendentals=B_pad * (O_pad + 1),
        bytes_accessed=(B_pad * S_pad * 4                     # token ids
                        + (V_pad * D_pad + D_pad * H_pad + H_pad * O_pad
                           + H_pad + O_pad) * 4               # table + weights
                        + B_pad * O_pad * 4),                 # output
    )

    out = pl.pallas_call(
        kernel,
        out_shape=jax.ShapeDtypeStruct((B_pad, O_pad), f32),
        grid_spec=pltpu.PrefetchScalarGridSpec(
            num_scalar_prefetch=0,
            grid=(nb,),
            in_specs=[
                pl.BlockSpec((TB * S_pad, 1), lambda i: (i, 0)),   # token ids per tile
                pl.BlockSpec((V_pad, D_pad), lambda i: (0, 0)),    # emb table (resident)
                pl.BlockSpec((D_pad, H_pad), lambda i: (0, 0)),    # w1 (resident)
                pl.BlockSpec((1, H_pad), lambda i: (0, 0)),        # b1
                pl.BlockSpec((H_pad, O_pad), lambda i: (0, 0)),    # w2
                pl.BlockSpec((1, O_pad), lambda i: (0, 0)),        # b2
            ],
            out_specs=pl.BlockSpec((TB, O_pad), lambda i: (i, 0)),
        ),
        compiler_params=pltpu.CompilerParams(
            dimension_semantics=("parallel",),
        ),
        cost_estimate=cost,
    )(ids_col, emb_pad, w1_pad, b1_pad, w2_pad, b2_pad)

    return out[:B, :O]


if __name__ == "__main__":
    # Small deterministic setup consistent with the module:
    #   embedding_dim=32, hidden_size=100 (module default), output_size=2,
    #   vocab_size=50, batch=16, seq_len=8  (-> 2 batch-tile grid steps).
    # TODO(synk): the real module reads GloVe vectors from disk; a deterministic
    # random embedding table stands in for them here.
    B, S = 16, 8
    VOCAB, D, H, O = 50, 32, 100, 2

    key = jax.random.PRNGKey(0)
    k_emb, k_w1, k_b1, k_w2, k_b2, k_ids = jax.random.split(key, 6)

    emb_table = jax.random.normal(k_emb, (VOCAB, D), dtype=jnp.float32) * 0.1
    w1 = jax.random.normal(k_w1, (D, H), dtype=jnp.float32) * 0.1
    b1 = jax.random.normal(k_b1, (H,), dtype=jnp.float32) * 0.01
    w2 = jax.random.normal(k_w2, (H, O), dtype=jnp.float32) * 0.1
    b2 = jax.random.normal(k_b2, (O,), dtype=jnp.float32) * 0.01

    token_ids = jax.random.randint(k_ids, (B, S), 0, VOCAB, dtype=jnp.int32)

    out = dan2_forward(token_ids, emb_table, w1, b1, w2, b2)
    out = jax.block_until_ready(out)

    # Pure-JAX reference (matches the PyTorch forward).
    emb = jnp.take(emb_table, token_ids, axis=0)
    mean = jnp.mean(emb, axis=1)
    h = jnp.maximum(mean @ w1 + b1, 0.0)
    o = jnp.maximum(h @ w2 + b2, 0.0)
    ref = jax.nn.log_softmax(o, axis=1)

    assert out.shape == (B, O)
    assert jnp.allclose(out, ref, atol=1e-3, rtol=1e-3), (
        f"max abs err = {jnp.max(jnp.abs(out - ref))}")
    print("KERNEL_OK")
</pallas_src>

<mosaic_0001>
module attributes {stable_mosaic.version = 11 : i64} {
  func.func @kernel(%arg0: i32, %arg1: memref<64x1xi32, #tpu.memory_space<vmem>>, %arg2: memref<128x128xf32, #tpu.memory_space<vmem>>, %arg3: memref<128x128xf32, #tpu.memory_space<vmem>>, %arg4: memref<1x128xf32, #tpu.memory_space<vmem>>, %arg5: memref<128x128xf32, #tpu.memory_space<vmem>>, %arg6: memref<1x128xf32, #tpu.memory_space<vmem>>, %arg7: memref<8x128xf32, #tpu.memory_space<vmem>>) attributes {dimension_semantics = [#tpu.dimension_semantics<parallel>], iteration_bounds = array<i64: 2>, scalar_prefetch = 0 : i64, scratch_operands = 0 : i64, tpu.core_type = #tpu.core_type<tc>, window_params = [{transform_indices = @transform_0, window_bounds = array<i64: 64, 1>}, {pipeline_mode = #tpu.pipeline_mode<synchronous>, transform_indices = @transform_1, window_bounds = array<i64: 128, 128>}, {pipeline_mode = #tpu.pipeline_mode<synchronous>, transform_indices = @transform_2, window_bounds = array<i64: 128, 128>}, {pipeline_mode = #tpu.pipeline_mode<synchronous>, transform_indices = @transform_3, window_bounds = array<i64: 1, 128>}, {pipeline_mode = #tpu.pipeline_mode<synchronous>, transform_indices = @transform_4, window_bounds = array<i64: 128, 128>}, {pipeline_mode = #tpu.pipeline_mode<synchronous>, transform_indices = @transform_5, window_bounds = array<i64: 1, 128>}, {transform_indices = @transform_6, window_bounds = array<i64: 8, 128>}]} {
    %c0 = arith.constant 0 : index
    %c0_0 = arith.constant 0 : index
    %0 = vector.load %arg1[%c0, %c0_0] : memref<64x1xi32, #tpu.memory_space<vmem>>, vector<64x1xi32>
    %1 = tpu.iota {dimensions = array<i32: 1>} : vector<64x128xi32>
    %2 = vector.broadcast %0 : vector<64x1xi32> to vector<64x128xi32>
    %3 = arith.cmpi eq, %2, %1 : vector<64x128xi32>
    %4 = arith.extui %3 : vector<64x128xi1> to vector<64x128xi32>
    %5 = arith.sitofp %4 : vector<64x128xi32> to vector<64x128xf32>
    %6 = vector.shape_cast %5 : vector<64x128xf32> to vector<8x8x128xf32>
    %cst = arith.constant dense<0.000000e+00> : vector<8x128xf32>
    %7 = vector.multi_reduction <add>, %6, %cst [1] : vector<8x8x128xf32> to vector<8x128xf32>
    %c0_1 = arith.constant 0 : index
    %c0_2 = arith.constant 0 : index
    %8 = vector.load %arg2[%c0_1, %c0_2] : memref<128x128xf32, #tpu.memory_space<vmem>>, vector<128x128xf32>
    %cst_3 = arith.constant dense<0.000000e+00> : vector<8x128xf32>
    %9 = tpu.matmul %7, %8, %cst_3 {dimension_numbers = #tpu.dot_dimension_numbers<[1], [0], [0], [1], [0, 0, 1, 1], [], []>} : vector<8x128xf32>, vector<128x128xf32>, vector<8x128xf32> -> vector<8x128xf32>
    %cst_4 = arith.constant 1.250000e-01 : f32
    %10 = vector.broadcast %cst_4 : f32 to vector<8x128xf32>
    %11 = arith.mulf %9, %10 : vector<8x128xf32>
    %c0_5 = arith.constant 0 : index
    %c0_6 = arith.constant 0 : index
    %12 = vector.load %arg3[%c0_5, %c0_6] : memref<128x128xf32, #tpu.memory_space<vmem>>, vector<128x128xf32>
    %cst_7 = arith.constant dense<0.000000e+00> : vector<8x128xf32>
    %13 = tpu.matmul %11, %12, %cst_7 {dimension_numbers = #tpu.dot_dimension_numbers<[1], [0], [0], [1], [0, 0, 1, 1], [], []>} : vector<8x128xf32>, vector<128x128xf32>, vector<8x128xf32> -> vector<8x128xf32>
    %c0_8 = arith.constant 0 : index
    %c0_9 = arith.constant 0 : index
    %14 = vector.load %arg4[%c0_8, %c0_9] : memref<1x128xf32, #tpu.memory_space<vmem>>, vector<1x128xf32>
    %15 = vector.broadcast %14 : vector<1x128xf32> to vector<8x128xf32>
    %16 = arith.addf %13, %15 : vector<8x128xf32>
    %cst_10 = arith.constant 0.000000e+00 : f32
    %17 = vector.broadcast %cst_10 : f32 to vector<8x128xf32>
    %18 = arith.maximumf %16, %17 : vector<8x128xf32>
    %c0_11 = arith.constant 0 : index
    %c0_12 = arith.constant 0 : index
    %19 = vector.load %arg5[%c0_11, %c0_12] : memref<128x128xf32, #tpu.memory_space<vmem>>, vector<128x128xf32>
    %cst_13 = arith.constant dense<0.000000e+00> : vector<8x128xf32>
    %20 = tpu.matmul %18, %19, %cst_13 {dimension_numbers = #tpu.dot_dimension_numbers<[1], [0], [0], [1], [0, 0, 1, 1], [], []>} : vector<8x128xf32>, vector<128x128xf32>, vector<8x128xf32> -> vector<8x128xf32>
    %c0_14 = arith.constant 0 : index
    %c0_15 = arith.constant 0 : index
    %21 = vector.load %arg6[%c0_14, %c0_15] : memref<1x128xf32, #tpu.memory_space<vmem>>, vector<1x128xf32>
    %22 = vector.broadcast %21 : vector<1x128xf32> to vector<8x128xf32>
    %23 = arith.addf %20, %22 : vector<8x128xf32>
    %cst_16 = arith.constant 0.000000e+00 : f32
    %24 = vector.broadcast %cst_16 : f32 to vector<8x128xf32>
    %25 = arith.maximumf %23, %24 : vector<8x128xf32>
    %26 = tpu.iota {dimensions = array<i32: 1>} : vector<8x128xi32>
    %c2_i32 = arith.constant 2 : i32
    %27 = vector.broadcast %c2_i32 : i32 to vector<8x128xi32>
    %28 = arith.cmpi slt, %26, %27 : vector<8x128xi32>
    %cst_17 = arith.constant -1.000000e+30 : f32
    %29 = vector.broadcast %cst_17 : f32 to vector<8x128xf32>
    %30 = arith.select %28, %25, %29 : vector<8x128xi1>, vector<8x128xf32>
    %cst_18 = arith.constant dense<0xFF800000> : vector<8xf32>
    %31 = vector.multi_reduction <maximumf>, %30, %cst_18 [1] : vector<8x128xf32> to vector<8xf32>
    %32 = vector.shape_cast %31 : vector<8xf32> to vector<8x1xf32>
    %33 = vector.broadcast %32 : vector<8x1xf32> to vector<8x128xf32>
    %34 = arith.subf %30, %33 : vector<8x128xf32>
    %35 = math.exp %34 : vector<8x128xf32>
    %cst_19 = arith.constant dense<0.000000e+00> : vector<8xf32>
    %36 = vector.multi_reduction <add>, %35, %cst_19 [1] : vector<8x128xf32> to vector<8xf32>
    %37 = vector.shape_cast %36 : vector<8xf32> to vector<8x1xf32>
    %38 = math.log %37 : vector<8x1xf32>
    %39 = arith.addf %38, %32 : vector<8x1xf32>
    %40 = vector.broadcast %39 : vector<8x1xf32> to vector<8x128xf32>
    %41 = arith.subf %30, %40 : vector<8x128xf32>
    %c0_20 = arith.constant 0 : index
    %c0_21 = arith.constant 0 : index
    %42 = vector.load %arg7[%c0_20, %c0_21] : memref<8x128xf32, #tpu.memory_space<vmem>>, vector<8x128xf32>
    tpu.vector_store %arg7[%c0_20, %c0_21], %41 {strides = array<i32>} : memref<8x128xf32, #tpu.memory_space<vmem>>, vector<8x128xf32>,
    return
  }
  func.func @transform_0(%arg0: i32) -> (i32, i32) {
    %c0_i32 = arith.constant 0 : i32
    %c0_i32_0 = arith.constant 0 : i32
    return %arg0, %c0_i32 : i32, i32
  }
  func.func @transform_1(%arg0: i32) -> (i32, i32) {
    %c0_i32 = arith.constant 0 : i32
    %c0_i32_0 = arith.constant 0 : i32
    %c0_i32_1 = arith.constant 0 : i32
    return %c0_i32, %c0_i32_0 : i32, i32
  }
  func.func @transform_2(%arg0: i32) -> (i32, i32) {
    %c0_i32 = arith.constant 0 : i32
    %c0_i32_0 = arith.constant 0 : i32
    %c0_i32_1 = arith.constant 0 : i32
    return %c0_i32, %c0_i32_0 : i32, i32
  }
  func.func @transform_3(%arg0: i32) -> (i32, i32) {
    %c0_i32 = arith.constant 0 : i32
    %c0_i32_0 = arith.constant 0 : i32
    %c0_i32_1 = arith.constant 0 : i32
    return %c0_i32, %c0_i32_0 : i32, i32
  }
  func.func @transform_4(%arg0: i32) -> (i32, i32) {
    %c0_i32 = arith.constant 0 : i32
    %c0_i32_0 = arith.constant 0 : i32
    %c0_i32_1 = arith.constant 0 : i32
    return %c0_i32, %c0_i32_0 : i32, i32
  }
  func.func @transform_5(%arg0: i32) -> (i32, i32) {
    %c0_i32 = arith.constant 0 : i32
    %c0_i32_0 = arith.constant 0 : i32
    %c0_i32_1 = arith.constant 0 : i32
    return %c0_i32, %c0_i32_0 : i32, i32
  }
  func.func @transform_6(%arg0: i32) -> (i32, i32) {
    %c0_i32 = arith.constant 0 : i32
    %c0_i32_0 = arith.constant 0 : i32
    return %arg0, %c0_i32 : i32, i32
  }
}

</mosaic_0001>

<llo_original>
// kernel: tpu_custom_call.1
$region0: #{tpu_custom_call.1}
  #allocation0 [shape = 'u32[]', space=smem, size = 0x4, offset = 0x4, fixed_abs, tag = 'smem constant byte address 0x4 - core index']
  #allocation1 [shape = 'u32[144,128]{1,0:T(1,128)}', space=vmem, size = 0x12000, scoped, tag = 'internal scratch']
  %s0 = inlined_call_operand.vmem [shape: s32[128,1], index: 0, kind: input, shape index: {}]
  %s1 = inlined_call_operand.vmem [shape: f32[128,128], index: 1, kind: input, shape index: {}]
  %s2 = inlined_call_operand.hbm [shape: f32[128,128], index: 2, kind: input, shape index: {}]
  %s3 = inlined_call_operand.vmem [shape: f32[1,128], index: 3, kind: input, shape index: {}]
  %s4 = inlined_call_operand.hbm [shape: f32[128,128], index: 4, kind: input, shape index: {}]
  %s5 = inlined_call_operand.vmem [shape: f32[1,128], index: 5, kind: input, shape index: {}]
  %s6 = inlined_call_operand.hbm [shape: f32[16,128], index: 6, kind: output, shape index: {}]
  %s7 = sld [smem:[#allocation0]]
  $region65: #{tpu_custom_call.1} parent=0
    _
  %s9 = ssub.s32 1, %s7
  %s10 = scalar_select 0, %s9, %s7
  $region1: #{tpu_custom_call.1} parent=0
    #allocation2 [shape = 'u8[65536]{0}', space=vmem, size = 0x10000, scoped, tag = 'input window, operand 2, single buffered']
    #allocation3 [shape = 's32[2]{0}', space=sflag, size = 0x8, scoped, tag = 'scoped memory for tpu_custom_call.1']
    #allocation4 [shape = 's32[2]{0}', space=sflag, size = 0x8, scoped, tag = 'scoped memory for tpu_custom_call.1']
    #allocation5 [shape = 'u8[65536]{0}', space=vmem, size = 0x10000, scoped, tag = 'input window, operand 4, single buffered']
    #allocation6 [shape = 's32[1]{0}', space=sflag, size = 0x4, scoped, tag = 'scoped memory for tpu_custom_call.1']
    #allocation7 [shape = 'u8[8192]{0}', space=vmem, size = 0x2000, scoped, tag = 'output window, operand 0']
    %11 = vsyncpa [#allocation3], 0
    %12 = vsyncpa [#allocation6], 0
    %13 = vsyncpa [#allocation4], 0
    %s14 = scalar_lea.sflag [#allocation4], 1
    %15 = vsyncpa %s14, 0
    loop: start=0, step=1, limit=4
    $region2: #{tpu_custom_call.1} parent=1 // loop_pre_header
      _
    $region3: #{tpu_custom_call.1} parent=1 // loop_header
      %s17 = sphi 0, %s21
      %p18 = scmp.ge.s32.totalorder %s17, 4
      %s27 = sphi 0, %s29
      %s30 = sphi 0, %s27
      %s31 = sphi 0, %s30
      %s47 = sphi 0, %s31
      %s51 = sphi 0, %s51
      %s53 = sphi 0, %s51
      %s54 = sphi 0, %s53
      %s68 = sphi 0, %s54
      %s72 = sphi 0, %s72
      %s74 = sphi 0, %s72
      %s75 = sphi 0, %s74
      %s89 = sphi 0, %s75
      %s93 = sphi 0, %s93
      %s95 = sphi 0, %s93
      %s96 = sphi 0, %s95
      %s110 = sphi 0, %s96
      %s114 = sphi 0, %s114
      %s116 = sphi 0, %s114
      %s117 = sphi 0, %s116
      %s131 = sphi 0, %s117
      %s135 = sphi 0, %s135
      %s137 = sphi 0, %s135
      %s138 = sphi 0, %s137
      %s152 = sphi 0, %s138
      %s158 = sphi 0, %s160
      %s161 = sphi 0, %s158
      %s162 = sphi 0, %s161
      %s178 = sphi 0, %s162
    $region4: #{tpu_custom_call.1} parent=1 // loop_header_branch
      %20 = sbr.rel (%p18) target = $region8
    $region5: #{tpu_custom_call.1} parent=1 // loop_body
      %s22 = ssub.s32 %s17, 1
      %s23 = ssub.s32 %s17, 2
      %s24 = sadd.s32 %s17, 1
      %s25 = ssub.s32 %s17, %s24
      %p26 = scmp.eq.s32.totalorder %s25, 0
      %s28 = sadd.s32 %s27, 1
      %s29 = scalar_select %p26, %s27, %s28
      %p32 = pneg %p26
      %p33 = scmp.eq.s32.totalorder %s17, 1
      %p34 = por %p32, %p33
      %p35 = scmp.ne.s32.totalorder %s27, %s30
      %p36 = scmp.eq.s32.totalorder %s17, 0
      %p37 = por %p35, %p36
      %p38 = scmp.ne.s32.totalorder %s27, %s30
      %p39 = scmp.eq.s32.totalorder %s22, 1
      %p40 = por %p38, %p39
      %p41 = scmp.ne.s32.totalorder %s30, %s31
      %p42 = scmp.eq.s32.totalorder %s22, 0
      %p43 = por %p41, %p42
      %p44 = scmp.ne.s32.totalorder %s30, %s31
      %p45 = scmp.eq.s32.totalorder %s23, 1
      %p46 = por %p44, %p45
      %p48 = scmp.ne.s32.totalorder %s31, %s47
      %p49 = scmp.eq.s32.totalorder %s23, 0
      %p50 = por %p48, %p49
      %s52 = sadd.s32 %s51, 1
      %p55 = scmp.eq.s32.totalorder %s17, 1
      %p56 = scmp.ne.s32.totalorder %s51, %s53
      %p57 = scmp.eq.s32.totalorder %s17, 0
      %p58 = por %p56, %p57
      %p59 = scmp.ne.s32.totalorder %s51, %s53
      %p60 = scmp.eq.s32.totalorder %s22, 1
      %p61 = por %p59, %p60
      %p62 = scmp.ne.s32.totalorder %s53, %s54
      %p63 = scmp.eq.s32.totalorder %s22, 0
      %p64 = por %p62, %p63
      %p65 = scmp.ne.s32.totalorder %s53, %s54
      %p66 = scmp.eq.s32.totalorder %s23, 1
      %p67 = por %p65, %p66
      %p69 = scmp.ne.s32.totalorder %s54, %s68
      %p70 = scmp.eq.s32.totalorder %s23, 0
      %p71 = por %p69, %p70
      %s73 = sadd.s32 %s72, 1
      %p76 = scmp.eq.s32.totalorder %s17, 1
      %p77 = scmp.ne.s32.totalorder %s72, %s74
      %p78 = scmp.eq.s32.totalorder %s17, 0
      %p79 = por %p77, %p78
      %p80 = scmp.ne.s32.totalorder %s72, %s74
      %p81 = scmp.eq.s32.totalorder %s22, 1
      %p82 = por %p80, %p81
      %p83 = scmp.ne.s32.totalorder %s74, %s75
      %p84 = scmp.eq.s32.totalorder %s22, 0
      %p85 = por %p83, %p84
      %p86 = scmp.ne.s32.totalorder %s74, %s75
      %p87 = scmp.eq.s32.totalorder %s23, 1
      %p88 = por %p86, %p87
      %p90 = scmp.ne.s32.totalorder %s75, %s89
      %p91 = scmp.eq.s32.totalorder %s23, 0
      %p92 = por %p90, %p91
      %s94 = sadd.s32 %s93, 1
      %p97 = scmp.eq.s32.totalorder %s17, 1
      %p98 = scmp.ne.s32.totalorder %s93, %s95
      %p99 = scmp.eq.s32.totalorder %s17, 0
      %p100 = por %p98, %p99
      %p101 = scmp.ne.s32.totalorder %s93, %s95
      %p102 = scmp.eq.s32.totalorder %s22, 1
      %p103 = por %p101, %p102
      %p104 = scmp.ne.s32.totalorder %s95, %s96
      %p105 = scmp.eq.s32.totalorder %s22, 0
      %p106 = por %p104, %p105
      %p107 = scmp.ne.s32.totalorder %s95, %s96
      %p108 = scmp.eq.s32.totalorder %s23, 1
      %p109 = por %p107, %p108
      %p111 = scmp.ne.s32.totalorder %s96, %s110
      %p112 = scmp.eq.s32.totalorder %s23, 0
      %p113 = por %p111, %p112
      %s115 = sadd.s32 %s114, 1
      %p118 = scmp.eq.s32.totalorder %s17, 1
      %p119 = scmp.ne.s32.totalorder %s114, %s116
      %p120 = scmp.eq.s32.totalorder %s17, 0
      %p121 = por %p119, %p120
      %p122 = scmp.ne.s32.totalorder %s114, %s116
      %p123 = scmp.eq.s32.totalorder %s22, 1
      %p124 = por %p122, %p123
      %p125 = scmp.ne.s32.totalorder %s116, %s117
      %p126 = scmp.eq.s32.totalorder %s22, 0
      %p127 = por %p125, %p126
      %p128 = scmp.ne.s32.totalorder %s116, %s117
      %p129 = scmp.eq.s32.totalorder %s23, 1
      %p130 = por %p128, %p129
      %p132 = scmp.ne.s32.totalorder %s117, %s131
      %p133 = scmp.eq.s32.totalorder %s23, 0
      %p134 = por %p132, %p133
      %s136 = sadd.s32 %s135, 1
      %p139 = scmp.eq.s32.totalorder %s17, 1
      %p140 = scmp.ne.s32.totalorder %s135, %s137
      %p141 = scmp.eq.s32.totalorder %s17, 0
      %p142 = por %p140, %p141
      %p143 = scmp.ne.s32.totalorder %s135, %s137
      %p144 = scmp.eq.s32.totalorder %s22, 1
      %p145 = por %p143, %p144
      %p146 = scmp.ne.s32.totalorder %s137, %s138
      %p147 = scmp.eq.s32.totalorder %s22, 0
      %p148 = por %p146, %p147
      %p149 = scmp.ne.s32.totalorder %s137, %s138
      %p150 = scmp.eq.s32.totalorder %s23, 1
      %p151 = por %p149, %p150
      %p153 = scmp.ne.s32.totalorder %s138, %s152
      %p154 = scmp.eq.s32.totalorder %s23, 0
      %p155 = por %p153, %p154
      %s156 = ssub.s32 %s17, %s24
      %p157 = scmp.eq.s32.totalorder %s156, 0
      %s159 = sadd.s32 %s158, 1
      %s160 = scalar_select %p157, %s158, %s159
      %p163 = pneg %p157
      %p164 = scmp.eq.s32.totalorder %s17, 1
      %p165 = por %p163, %p164
      %p166 = scmp.ne.s32.totalorder %s158, %s161
      %p167 = scmp.eq.s32.totalorder %s17, 0
      %p168 = por %p166, %p167
      %p169 = scmp.ne.s32.totalorder %s158, %s161
      %p170 = scmp.eq.s32.totalorder %s22, 1
      %p171 = por %p169, %p170
      %p172 = scmp.ne.s32.totalorder %s161, %s162
      %p173 = scmp.eq.s32.totalorder %s22, 0
      %p174 = por %p172, %p173
      %p175 = scmp.ne.s32.totalorder %s161, %s162
      %p176 = scmp.eq.s32.totalorder %s23, 1
      %p177 = por %p175, %p176
      %p179 = scmp.ne.s32.totalorder %s162, %s178
      %p180 = scmp.eq.s32.totalorder %s23, 0
      %p181 = por %p179, %p180
      %p182 = scmp.le.s32.totalorder 1, %s17
      %p183 = scmp.lt.s32.totalorder %s17, 3
      %p184 = pnand %p182, %p183
      %p185 = pneg %p184
      // Predicated region
      $region9: #{tpu_custom_call.1} parent=5 // pred_check
        _
      $region10: #{tpu_custom_call.1} parent=5 // pred_check_branch
        %187 = sbr.rel (%p184) target = $region12
      $region11: #{tpu_custom_call.1} parent=5 // pred_region
        %s188 = ssub.s32 %s17, 1
        // Predicated region
        $region13: #{tpu_custom_call.1} parent=11 // pred_check
          %p189 = pneg %p64
        $region14: #{tpu_custom_call.1} parent=11 // pred_check_branch
          %191 = sbr.rel (%p189) target = $region16
        $region15: #{tpu_custom_call.1} parent=11 // pred_region
          _
        $region16: #{tpu_custom_call.1} parent=11 // pred_fallthru
          _
        // Predicated region
        $region17: #{tpu_custom_call.1} parent=11 // pred_check
          %p192 = pneg %p85
        $region18: #{tpu_custom_call.1} parent=11 // pred_check_branch
          %194 = sbr.rel (%p192) target = $region20
        $region19: #{tpu_custom_call.1} parent=11 // pred_region
          %s196 = ssub.s32 2048, 2048
          %197 = vsyncadd [#allocation3], %s196
          %s198 = sshll.u32 [#allocation2], 4
          %s199 = int_to_ptr.vmem [resolvable:$true] %s198
          %204 = dma.hbm_to_vmem [thread:$0]  %s2, 2048, %s199, [#allocation3], 128, 128, 8
        $region20: #{tpu_custom_call.1} parent=11 // pred_fallthru
          _
        // Predicated region
        $region21: #{tpu_custom_call.1} parent=11 // pred_check
          %p205 = pneg %p106
        $region22: #{tpu_custom_call.1} parent=11 // pred_check_branch
          %207 = sbr.rel (%p205) target = $region24
        $region23: #{tpu_custom_call.1} parent=11 // pred_region
          _
        $region24: #{tpu_custom_call.1} parent=11 // pred_fallthru
          _
        // Predicated region
        $region25: #{tpu_custom_call.1} parent=11 // pred_check
          %p208 = pneg %p127
        $region26: #{tpu_custom_call.1} parent=11 // pred_check_branch
          %210 = sbr.rel (%p208) target = $region28
        $region27: #{tpu_custom_call.1} parent=11 // pred_region
          %s212 = ssub.s32 2048, 2048
          %213 = vsyncadd [#allocation6], %s212
          %s214 = sshll.u32 [#allocation5], 4
          %s215 = int_to_ptr.vmem [resolvable:$true] %s214
          %220 = dma.hbm_to_vmem [thread:$0]  %s4, 2048, %s215, [#allocation6], 128, 128, 8
        $region28: #{tpu_custom_call.1} parent=11 // pred_fallthru
          _
        // Predicated region
        $region29: #{tpu_custom_call.1} parent=11 // pred_check
          %p221 = pneg %p148
        $region30: #{tpu_custom_call.1} parent=11 // pred_check_branch
          %223 = sbr.rel (%p221) target = $region32
        $region31: #{tpu_custom_call.1} parent=11 // pred_region
          _
        $region32: #{tpu_custom_call.1} parent=11 // pred_fallthru
          _
      $region12: #{tpu_custom_call.1} parent=5 // pred_fallthru
        _
      %p224 = scmp.lt.s32.totalorder %s17, 2
      // Predicated region
      $region33: #{tpu_custom_call.1} parent=5 // pred_check
        %p225 = pneg %p224
      $region34: #{tpu_custom_call.1} parent=5 // pred_check_branch
        %227 = sbr.rel (%p225) target = $region36
      $region35: #{tpu_custom_call.1} parent=5 // pred_region
        // Predicated region
        $region37: #{tpu_custom_call.1} parent=35 // pred_check
          %p228 = pneg %p37
        $region38: #{tpu_custom_call.1} parent=35 // pred_check_branch
          %230 = sbr.rel (%p228) target = $region40
        $region39: #{tpu_custom_call.1} parent=35 // pred_region
          %s231 = smul.u32 8, %s17
          %p232 = scmp.lt.s32.totalorder %s231, 15
          %s233 = scalar_select %p232, %s231, 15
          %s234 = smul.addr %s233, 8
          %s235 = scalar_lea.vmem %s0, %s234
          %s236 = smul.u32 8, %s17
        $region40: #{tpu_custom_call.1} parent=35 // pred_fallthru
          _
      $region36: #{tpu_custom_call.1} parent=5 // pred_fallthru
        _
      %p237 = scmp.le.s32.totalorder 1, %s17
      %p238 = scmp.lt.s32.totalorder %s17, 3
      %p239 = pnand %p237, %p238
      %p240 = pneg %p239
      // Predicated region
      $region41: #{tpu_custom_call.1} parent=5 // pred_check
        _
      $region42: #{tpu_custom_call.1} parent=5 // pred_check_branch
        %242 = sbr.rel (%p239) target = $region44
      $region43: #{tpu_custom_call.1} parent=5 // pred_region
        %s243 = ssub.s32 %s17, 1
        // Predicated region
        $region45: #{tpu_custom_call.1} parent=43 // pred_check
          %p244 = pneg %p85
        $region46: #{tpu_custom_call.1} parent=43 // pred_check_branch
          %246 = sbr.rel (%p244) target = $region48
        $region47: #{tpu_custom_call.1} parent=43 // pred_region
          %247 = dma.done [#allocation3], 2048
        $region48: #{tpu_custom_call.1} parent=43 // pred_fallthru
          _
        // Predicated region
        $region49: #{tpu_custom_call.1} parent=43 // pred_check
          %p248 = pneg %p127
        $region50: #{tpu_custom_call.1} parent=43 // pred_check_branch
          %250 = sbr.rel (%p248) target = $region52
        $region51: #{tpu_custom_call.1} parent=43 // pred_region
          %251 = dma.done [#allocation6], 2048
        $region52: #{tpu_custom_call.1} parent=43 // pred_fallthru
          _
        %s252 = smul.u32 8, %s22
        %p253 = scmp.lt.s32.totalorder %s252, 15
        %s254 = scalar_select %p253, %s252, 15
        %s255 = smul.addr %s254, 8
        %s256 = scalar_lea.vmem %s0, %s255
        %p257 = pneg %p43
        %p258 = pneg %p40
        %p259 = pneg %p64
        %p260 = pneg %p61
        %p261 = pneg %p85
        %p262 = pneg %p82
        %p263 = pneg %p106
        %p264 = pneg %p103
        %p265 = pneg %p127
        %p266 = pneg %p124
        %p267 = pneg %p148
        %p268 = pneg %p145
        %p269 = pneg %p174
        %p270 = pneg %p171
        %s271 = sand.u32 %s161, 1
        %s272 = scalar_lea.sflag [#allocation4], %s271
        %s273 = sand.u32 %s161, 1
        %s274 = smul.addr %s273, 8
        %s275 = scalar_lea.vmem [#allocation7], %s274
        %s276 = smul.u32 8, %s22
        %p277 = scmp.lt.s32.totalorder %s276, 15
        %s278 = scalar_select %p277, %s276, 15
        %s279 = smul.addr %s278, 8
        %s280 = scalar_lea.vmem %s0, %s279
        %s281 = smul.u32 8, %s22
        %v282 = vld [vmem:[%s280] sm:$0xff]
        %v283 = vld [vmem:[%s280 + $0x8] sm:$0xff]
        %v284 = vld [vmem:[%s280 + $0x10] sm:$0xff]
        %v285 = vld [vmem:[%s280 + $0x18] sm:$0xff]
        %v286 = vld [vmem:[%s280 + $0x20] sm:$0xff]
        %v287 = vld [vmem:[%s280 + $0x28] sm:$0xff]
        %v288 = vld [vmem:[%s280 + $0x30] sm:$0xff]
        %v289 = vld [vmem:[%s280 + $0x38] sm:$0xff]
        %v290 = vlaneseq
        %v291 = vand.u32 %v290, 127
        %292 = vset.pattern.permute.xlu0 0
        %293 = vperm.xlu0 %292, %v282
        %v294 = vpop.permute.xlu0 %293
        %295 = vset.pattern.permute.xlu0 0
        %296 = vperm.xlu0 %295, %v283
        %v297 = vpop.permute.xlu0 %296
        %298 = vset.pattern.permute.xlu0 0
        %299 = vperm.xlu0 %298, %v284
        %v300 = vpop.permute.xlu0 %299
        %301 = vset.pattern.permute.xlu0 0
        %302 = vperm.xlu0 %301, %v285
        %v303 = vpop.permute.xlu0 %302
        %304 = vset.pattern.permute.xlu0 0
        %305 = vperm.xlu0 %304, %v286
        %v306 = vpop.permute.xlu0 %305
        %307 = vset.pattern.permute.xlu0 0
        %308 = vperm.xlu0 %307, %v287
        %v309 = vpop.permute.xlu0 %308
        %310 = vset.pattern.permute.xlu0 0
        %311 = vperm.xlu0 %310, %v288
        %v312 = vpop.permute.xlu0 %311
        %313 = vset.pattern.permute.xlu0 0
        %314 = vperm.xlu0 %313, %v289
        %v315 = vpop.permute.xlu0 %314
        %vm316 = vcmp.eq.s32.totalorder %v294, %v291
        %vm317 = vcmp.eq.s32.totalorder %v297, %v291
        %vm318 = vcmp.eq.s32.totalorder %v300, %v291
        %vm319 = vcmp.eq.s32.totalorder %v303, %v291
        %vm320 = vcmp.eq.s32.totalorder %v306, %v291
        %vm321 = vcmp.eq.s32.totalorder %v309, %v291
        %vm322 = vcmp.eq.s32.totalorder %v312, %v291
        %vm323 = vcmp.eq.s32.totalorder %v315, %v291
        %v324 = vsel %vm316, 1, 0
        %v325 = vsel %vm317, 1, 0
        %v326 = vsel %vm318, 1, 0
        %v327 = vsel %vm319, 1, 0
        %v328 = vsel %vm320, 1, 0
        %v329 = vsel %vm321, 1, 0
        %v330 = vsel %vm322, 1, 0
        %v331 = vsel %vm323, 1, 0
        %v332 = vcvt.s32.f32 %v324
        %v333 = vcvt.s32.f32 %v325
        %v334 = vcvt.s32.f32 %v326
        %v335 = vcvt.s32.f32 %v327
        %v336 = vcvt.s32.f32 %v328
        %v337 = vcvt.s32.f32 %v329
        %v338 = vcvt.s32.f32 %v330
        %v339 = vcvt.s32.f32 %v331
        %v340 = vrot.slane %v332, 4
        %v341 = vadd.f32 %v332, %v340
        %v342 = vrot.slane %v341, 2
        %v343 = vadd.f32 %v341, %v342
        %v344 = vrot.slane %v343, 1
        %v345 = vadd.f32 %v343, %v344
        %v346 = vrot.slane %v333, 4
        %v347 = vadd.f32 %v333, %v346
        %v348 = vrot.slane %v347, 2
        %v349 = vadd.f32 %v347, %v348
        %v350 = vrot.slane %v349, 1
        %v351 = vadd.f32 %v349, %v350
        %v352 = vrot.slane %v334, 4
        %v353 = vadd.f32 %v334, %v352
        %v354 = vrot.slane %v353, 2
        %v355 = vadd.f32 %v353, %v354
        %v356 = vrot.slane %v355, 1
        %v357 = vadd.f32 %v355, %v356
        %v358 = vrot.slane %v335, 4
        %v359 = vadd.f32 %v335, %v358
        %v360 = vrot.slane %v359, 2
        %v361 = vadd.f32 %v359, %v360
        %v362 = vrot.slane %v361, 1
        %v363 = vadd.f32 %v361, %v362
        %v364 = vrot.slane %v336, 4
        %v365 = vadd.f32 %v336, %v364
        %v366 = vrot.slane %v365, 2
        %v367 = vadd.f32 %v365, %v366
        %v368 = vrot.slane %v367, 1
        %v369 = vadd.f32 %v367, %v368
        %v370 = vrot.slane %v337, 4
        %v371 = vadd.f32 %v337, %v370
        %v372 = vrot.slane %v371, 2
        %v373 = vadd.f32 %v371, %v372
        %v374 = vrot.slane %v373, 1
        %v375 = vadd.f32 %v373, %v374
        %v376 = vrot.slane %v338, 4
        %v377 = vadd.f32 %v338, %v376
        %v378 = vrot.slane %v377, 2
        %v379 = vadd.f32 %v377, %v378
        %v380 = vrot.slane %v379, 1
        %v381 = vadd.f32 %v379, %v380
        %v382 = vrot.slane %v339, 4
        %v383 = vadd.f32 %v339, %v382
        %v384 = vrot.slane %v383, 2
        %v385 = vadd.f32 %v383, %v384
        %v386 = vrot.slane %v385, 1
        %v387 = vadd.f32 %v385, %v386
        %v388 = vld [vmem:[%s1] sm:$0xff]
        %v389 = vld [vmem:[%s1 + $0x8] sm:$0xff]
        %v390 = vld [vmem:[%s1 + $0x10] sm:$0xff]
        %v391 = vld [vmem:[%s1 + $0x18] sm:$0xff]
        %v392 = vld [vmem:[%s1 + $0x20] sm:$0xff]
        %v393 = vld [vmem:[%s1 + $0x28] sm:$0xff]
        %v394 = vld [vmem:[%s1 + $0x30] sm:$0xff]
        %v395 = vld [vmem:[%s1 + $0x38] sm:$0xff]
        %v396 = vld [vmem:[%s1 + $0x40] sm:$0xff]
        %v397 = vld [vmem:[%s1 + $0x48] sm:$0xff]
        %v398 = vld [vmem:[%s1 + $0x50] sm:$0xff]
        %v399 = vld [vmem:[%s1 + $0x58] sm:$0xff]
        %v400 = vld [vmem:[%s1 + $0x60] sm:$0xff]
        %v401 = vld [vmem:[%s1 + $0x68] sm:$0xff]
        %v402 = vld [vmem:[%s1 + $0x70] sm:$0xff]
        %v403 = vld [vmem:[%s1 + $0x78] sm:$0xff]
        %vm412 = vcmask 1041409
        %v413 = vsel %vm412, %v351, %v345
        %vm414 = vcmask 1042434
        %v415 = vsel %vm414, %v357, %v413
        %vm416 = vcmask 1043459
        %v417 = vsel %vm416, %v363, %v415
        %vm418 = vcmask 1044484
        %v419 = vsel %vm418, %v369, %v417
        %vm420 = vcmask 1045509
        %v421 = vsel %vm420, %v375, %v419
        %vm422 = vcmask 1046534
        %v423 = vsel %vm422, %v381, %v421
        %vm424 = vcmask 1047559
        %v425 = vsel %vm424, %v387, %v423
        %427 = vmatprep.subr.mxu0 0.0
        %428 = vmatpush1.msra.mxu0 %v403
        %429 = vmatprep.subr.mxu0 0.0
        %430 = vmatpush1.msra.mxu0 %v402
        %431 = vmatprep.subr.mxu0 0.0
        %432 = vmatpush1.msra.mxu0 %v401
        %433 = vmatprep.subr.mxu0 0.0
        %434 = vmatpush1.msra.mxu0 %v400
        %435 = vmatprep.subr.mxu0 0.0
        %436 = vmatpush1.msra.mxu0 %v399
        %437 = vmatprep.subr.mxu0 0.0
        %438 = vmatpush1.msra.mxu0 %v398
        %439 = vmatprep.subr.mxu0 0.0
        %440 = vmatpush1.msra.mxu0 %v397
        %441 = vmatprep.subr.mxu0 0.0
        %442 = vmatpush1.msra.mxu0 %v396
        %443 = vmatprep.subr.mxu0 0.0
        %444 = vmatpush1.msra.mxu0 %v395
        %445 = vmatprep.subr.mxu0 0.0
        %446 = vmatpush1.msra.mxu0 %v394
        %447 = vmatprep.subr.mxu0 0.0
        %448 = vmatpush1.msra.mxu0 %v393
        %449 = vmatprep.subr.mxu0 0.0
        %450 = vmatpush1.msra.mxu0 %v392
        %451 = vmatprep.subr.mxu0 0.0
        %452 = vmatpush1.msra.mxu0 %v391
        %453 = vmatprep.subr.mxu0 0.0
        %454 = vmatpush1.msra.mxu0 %v390
        %455 = vmatprep.subr.mxu0 0.0
        %456 = vmatpush1.msra.mxu0 %v389
        %457 = vmatprep.subr.mxu0 0.0
        %458 = vmatpush1.msra.mxu0 %v388
        %459 = vmatprep.subr.mxu0 0.0
        %460 = vmatpush2.msra.mxu0 0.0
        %461 = vmatprep.subr.mxu0 0.0
        %462 = vmatpush2.msra.mxu0 0.0
        %463 = vmatprep.subr.mxu0 0.0
        %464 = vmatpush2.msra.mxu0 0.0
        %465 = vmatprep.subr.mxu0 0.0
        %466 = vmatpush2.msra.mxu0 0.0
        %467 = vmatprep.subr.mxu0 0.0
        %468 = vmatpush2.msra.mxu0 0.0
        %469 = vmatprep.subr.mxu0 0.0
        %470 = vmatpush2.msra.mxu0 0.0
        %471 = vmatprep.subr.mxu0 0.0
        %472 = vmatpush2.msra.mxu0 0.0
        %473 = vmatprep.subr.mxu0 0.0
        %474 = vmatpush2.msra.mxu0 0.0
        %475 = vmatprep.subr.mxu0 0.0
        %476 = vmatpush2.msra.mxu0 0.0
        %477 = vmatprep.subr.mxu0 0.0
        %478 = vmatpush2.msra.mxu0 0.0
        %479 = vmatprep.subr.mxu0 0.0
        %480 = vmatpush2.msra.mxu0 0.0
        %481 = vmatprep.subr.mxu0 0.0
        %482 = vmatpush2.msra.mxu0 0.0
        %483 = vmatprep.subr.mxu0 0.0
        %484 = vmatpush2.msra.mxu0 0.0
        %485 = vmatprep.subr.mxu0 0.0
        %486 = vmatpush2.msra.mxu0 0.0
        %487 = vmatprep.subr.mxu0 0.0
        %488 = vmatpush2.msra.mxu0 0.0
        %489 = vmatprep.subr.mxu0 0.0
        %490 = vmatpush2.msra.mxu0 0.0
        %491 = vmatprep.mubr.f32.mxu0 0.0
        %492 = vmatmul.mubr.f32.gmra.mxu0 %v425
        %v493 = vpop.f32.mrf.mxu0
        %v494 = vadd.f32 0.0, %v493
        %v495 = vpop.f32.mrf.mxu0
        %496 = vdwg.mxu0
        %v497 = vmul.f32 %v494, 0.125
        %v498 = vld [vmem:[#allocation2] sm:$0xff]
        %v499 = vld [vmem:[#allocation2 + $0x8] sm:$0xff]
        %v500 = vld [vmem:[#allocation2 + $0x10] sm:$0xff]
        %v501 = vld [vmem:[#allocation2 + $0x18] sm:$0xff]
        %v502 = vld [vmem:[#allocation2 + $0x20] sm:$0xff]
        %v503 = vld [vmem:[#allocation2 + $0x28] sm:$0xff]
        %v504 = vld [vmem:[#allocation2 + $0x30] sm:$0xff]
        %v505 = vld [vmem:[#allocation2 + $0x38] sm:$0xff]
        %v506 = vld [vmem:[#allocation2 + $0x40] sm:$0xff]
        %v507 = vld [vmem:[#allocation2 + $0x48] sm:$0xff]
        %v508 = vld [vmem:[#allocation2 + $0x50] sm:$0xff]
        %v509 = vld [vmem:[#allocation2 + $0x58] sm:$0xff]
        %v510 = vld [vmem:[#allocation2 + $0x60] sm:$0xff]
        %v511 = vld [vmem:[#allocation2 + $0x68] sm:$0xff]
        %v512 = vld [vmem:[#allocation2 + $0x70] sm:$0xff]
        %v513 = vld [vmem:[#allocation2 + $0x78] sm:$0xff]
        %v514 = vld [vmem:[%s3] sm:$0x1]
        %v516 = vlaneseq
        %v517 = vshrl.u32 %v516, 7
        %v518 = vsub.s32 0, %v517
        %v519 = vrot.slane %v514, %v518
        %521 = vmatprep.subr.mxu0 0.0
        %522 = vmatpush1.msra.mxu0 %v513
        %523 = vmatprep.subr.mxu0 0.0
        %524 = vmatpush1.msra.mxu0 %v512
        %525 = vmatprep.subr.mxu0 0.0
        %526 = vmatpush1.msra.mxu0 %v511
        %527 = vmatprep.subr.mxu0 0.0
        %528 = vmatpush1.msra.mxu0 %v510
        %529 = vmatprep.subr.mxu0 0.0
        %530 = vmatpush1.msra.mxu0 %v509
        %531 = vmatprep.subr.mxu0 0.0
        %532 = vmatpush1.msra.mxu0 %v508
        %533 = vmatprep.subr.mxu0 0.0
        %534 = vmatpush1.msra.mxu0 %v507
        %535 = vmatprep.subr.mxu0 0.0
        %536 = vmatpush1.msra.mxu0 %v506
        %537 = vmatprep.subr.mxu0 0.0
        %538 = vmatpush1.msra.mxu0 %v505
        %539 = vmatprep.subr.mxu0 0.0
        %540 = vmatpush1.msra.mxu0 %v504
        %541 = vmatprep.subr.mxu0 0.0
        %542 = vmatpush1.msra.mxu0 %v503
        %543 = vmatprep.subr.mxu0 0.0
        %544 = vmatpush1.msra.mxu0 %v502
        %545 = vmatprep.subr.mxu0 0.0
        %546 = vmatpush1.msra.mxu0 %v501
        %547 = vmatprep.subr.mxu0 0.0
        %548 = vmatpush1.msra.mxu0 %v500
        %549 = vmatprep.subr.mxu0 0.0
        %550 = vmatpush1.msra.mxu0 %v499
        %551 = vmatprep.subr.mxu0 0.0
        %552 = vmatpush1.msra.mxu0 %v498
        %553 = vmatprep.subr.mxu0 0.0
        %554 = vmatpush2.msra.mxu0 0.0
        %555 = vmatprep.subr.mxu0 0.0
        %556 = vmatpush2.msra.mxu0 0.0
        %557 = vmatprep.subr.mxu0 0.0
        %558 = vmatpush2.msra.mxu0 0.0
        %559 = vmatprep.subr.mxu0 0.0
        %560 = vmatpush2.msra.mxu0 0.0
        %561 = vmatprep.subr.mxu0 0.0
        %562 = vmatpush2.msra.mxu0 0.0
        %563 = vmatprep.subr.mxu0 0.0
        %564 = vmatpush2.msra.mxu0 0.0
        %565 = vmatprep.subr.mxu0 0.0
        %566 = vmatpush2.msra.mxu0 0.0
        %567 = vmatprep.subr.mxu0 0.0
        %568 = vmatpush2.msra.mxu0 0.0
        %569 = vmatprep.subr.mxu0 0.0
        %570 = vmatpush2.msra.mxu0 0.0
        %571 = vmatprep.subr.mxu0 0.0
        %572 = vmatpush2.msra.mxu0 0.0
        %573 = vmatprep.subr.mxu0 0.0
        %574 = vmatpush2.msra.mxu0 0.0
        %575 = vmatprep.subr.mxu0 0.0
        %576 = vmatpush2.msra.mxu0 0.0
        %577 = vmatprep.subr.mxu0 0.0
        %578 = vmatpush2.msra.mxu0 0.0
        %579 = vmatprep.subr.mxu0 0.0
        %580 = vmatpush2.msra.mxu0 0.0
        %581 = vmatprep.subr.mxu0 0.0
        %582 = vmatpush2.msra.mxu0 0.0
        %583 = vmatprep.subr.mxu0 0.0
        %584 = vmatpush2.msra.mxu0 0.0
        %585 = vmatprep.mubr.f32.mxu0 0.0
        %586 = vmatmul.mubr.f32.gmra.mxu0 %v497
        %v587 = vpop.f32.mrf.mxu0
        %v588 = vadd.f32 %v519, %v587
        %v589 = vpop.f32.mrf.mxu0
        %590 = vdwg.mxu0
        %v591 = vmax.f32 %v588, 0.0
        %v592 = vld [vmem:[#allocation5] sm:$0xff]
        %v593 = vld [vmem:[#allocation5 + $0x8] sm:$0xff]
        %v594 = vld [vmem:[#allocation5 + $0x10] sm:$0xff]
        %v595 = vld [vmem:[#allocation5 + $0x18] sm:$0xff]
        %v596 = vld [vmem:[#allocation5 + $0x20] sm:$0xff]
        %v597 = vld [vmem:[#allocation5 + $0x28] sm:$0xff]
        %v598 = vld [vmem:[#allocation5 + $0x30] sm:$0xff]
        %v599 = vld [vmem:[#allocation5 + $0x38] sm:$0xff]
        %v600 = vld [vmem:[#allocation5 + $0x40] sm:$0xff]
        %v601 = vld [vmem:[#allocation5 + $0x48] sm:$0xff]
        %v602 = vld [vmem:[#allocation5 + $0x50] sm:$0xff]
        %v603 = vld [vmem:[#allocation5 + $0x58] sm:$0xff]
        %v604 = vld [vmem:[#allocation5 + $0x60] sm:$0xff]
        %v605 = vld [vmem:[#allocation5 + $0x68] sm:$0xff]
        %v606 = vld [vmem:[#allocation5 + $0x70] sm:$0xff]
        %v607 = vld [vmem:[#allocation5 + $0x78] sm:$0xff]
        %v608 = vld [vmem:[%s5] sm:$0x1]
        %v610 = vlaneseq
        %v611 = vshrl.u32 %v610, 7
        %v612 = vsub.s32 0, %v611
        %v613 = vrot.slane %v608, %v612
        %615 = vmatprep.subr.mxu0 0.0
        %616 = vmatpush1.msra.mxu0 %v607
        %617 = vmatprep.subr.mxu0 0.0
        %618 = vmatpush1.msra.mxu0 %v606
        %619 = vmatprep.subr.mxu0 0.0
        %620 = vmatpush1.msra.mxu0 %v605
        %621 = vmatprep.subr.mxu0 0.0
        %622 = vmatpush1.msra.mxu0 %v604
        %623 = vmatprep.subr.mxu0 0.0
        %624 = vmatpush1.msra.mxu0 %v603
        %625 = vmatprep.subr.mxu0 0.0
        %626 = vmatpush1.msra.mxu0 %v602
        %627 = vmatprep.subr.mxu0 0.0
        %628 = vmatpush1.msra.mxu0 %v601
        %629 = vmatprep.subr.mxu0 0.0
        %630 = vmatpush1.msra.mxu0 %v600
        %631 = vmatprep.subr.mxu0 0.0
        %632 = vmatpush1.msra.mxu0 %v599
        %633 = vmatprep.subr.mxu0 0.0
        %634 = vmatpush1.msra.mxu0 %v598
        %635 = vmatprep.subr.mxu0 0.0
        %636 = vmatpush1.msra.mxu0 %v597
        %637 = vmatprep.subr.mxu0 0.0
        %638 = vmatpush1.msra.mxu0 %v596
        %639 = vmatprep.subr.mxu0 0.0
        %640 = vmatpush1.msra.mxu0 %v595
        %641 = vmatprep.subr.mxu0 0.0
        %642 = vmatpush1.msra.mxu0 %v594
        %643 = vmatprep.subr.mxu0 0.0
        %644 = vmatpush1.msra.mxu0 %v593
        %645 = vmatprep.subr.mxu0 0.0
        %646 = vmatpush1.msra.mxu0 %v592
        %647 = vmatprep.subr.mxu0 0.0
        %648 = vmatpush2.msra.mxu0 0.0
        %649 = vmatprep.subr.mxu0 0.0
        %650 = vmatpush2.msra.mxu0 0.0
        %651 = vmatprep.subr.mxu0 0.0
        %652 = vmatpush2.msra.mxu0 0.0
        %653 = vmatprep.subr.mxu0 0.0
        %654 = vmatpush2.msra.mxu0 0.0
        %655 = vmatprep.subr.mxu0 0.0
        %656 = vmatpush2.msra.mxu0 0.0
        %657 = vmatprep.subr.mxu0 0.0
        %658 = vmatpush2.msra.mxu0 0.0
        %659 = vmatprep.subr.mxu0 0.0
        %660 = vmatpush2.msra.mxu0 0.0
        %661 = vmatprep.subr.mxu0 0.0
        %662 = vmatpush2.msra.mxu0 0.0
        %663 = vmatprep.subr.mxu0 0.0
        %664 = vmatpush2.msra.mxu0 0.0
        %665 = vmatprep.subr.mxu0 0.0
        %666 = vmatpush2.msra.mxu0 0.0
        %667 = vmatprep.subr.mxu0 0.0
        %668 = vmatpush2.msra.mxu0 0.0
        %669 = vmatprep.subr.mxu0 0.0
        %670 = vmatpush2.msra.mxu0 0.0
        %671 = vmatprep.subr.mxu0 0.0
        %672 = vmatpush2.msra.mxu0 0.0
        %673 = vmatprep.subr.mxu0 0.0
        %674 = vmatpush2.msra.mxu0 0.0
        %675 = vmatprep.subr.mxu0 0.0
        %676 = vmatpush2.msra.mxu0 0.0
        %677 = vmatprep.subr.mxu0 0.0
        %678 = vmatpush2.msra.mxu0 0.0
        %679 = vmatprep.mubr.f32.mxu0 0.0
        %680 = vmatmul.mubr.f32.gmra.mxu0 %v591
        %v681 = vpop.f32.mrf.mxu0
        %v682 = vadd.f32 %v613, %v681
        %v683 = vpop.f32.mrf.mxu0
        %684 = vdwg.mxu0
        %v685 = vmax.f32 %v682, 0.0
        %vm686 = vcmp.lt.s32.totalorder %v291, 2
        %v687 = vsel %vm686, %v685, -1e+30
        %688 = vmax.xlane.f32.xlu0 %v687
        %v689 = vpop.xlane.xlu0 %688
        %v690 = vsub.f32 %v687, %v689
        %v691 = vmul.f32 %v690, 1.442695
        %v692 = vpow.pop %v691
        %693 = vadd.xlane.f32.xlu0 %v692
        %v694 = vpop.xlane.xlu0 %693
        %v695 = vlog2.pop %v694
        %v696 = vmul.f32 %v695, 0.6931472
        %v697 = vadd.f32 %v696, %v689
        %v698 = vsub.f32 %v687, %v697
        %699 = vst [vmem:[%s275] sm:$0xff] %v698
        %s700 = sand.u32 %s161, 1
        %s701 = scalar_lea.sflag [#allocation4], %s700
        %s702 = sand.u32 %s161, 1
        %s703 = smul.addr %s702, 8
        %s704 = scalar_lea.vmem [#allocation7], %s703
        // Predicated region
        $region53: #{tpu_custom_call.1} parent=43 // pred_check
          %p705 = pneg %p171
        $region54: #{tpu_custom_call.1} parent=43 // pred_check_branch
          %707 = sbr.rel (%p705) target = $region56
        $region55: #{tpu_custom_call.1} parent=43 // pred_region
          %s709 = ssub.s32 128, 128
          %710 = vsyncadd %s701, %s709
          %s711 = smul.addr %s22, 128
          %s712 = scalar_lea.hbm %s6, %s711
          %s714 = sshll.u32 %s704, 4
          %s715 = int_to_ptr.vmem [resolvable:$true] %s714
          %717 = dma.vmem_to_hbm [thread:$0]  %s715, 128, %s712, %s701
        $region56: #{tpu_custom_call.1} parent=43 // pred_fallthru
          _
      $region44: #{tpu_custom_call.1} parent=5 // pred_fallthru
        _
      %p718 = scmp.le.s32.totalorder 2, %s17
      // Predicated region
      $region57: #{tpu_custom_call.1} parent=5 // pred_check
        %p719 = pneg %p718
      $region58: #{tpu_custom_call.1} parent=5 // pred_check_branch
        %721 = sbr.rel (%p719) target = $region60
      $region59: #{tpu_custom_call.1} parent=5 // pred_region
        %s722 = ssub.s32 %s17, 2
        // Predicated region
        $region61: #{tpu_custom_call.1} parent=59 // pred_check
          %p723 = pneg %p177
        $region62: #{tpu_custom_call.1} parent=59 // pred_check_branch
          %725 = sbr.rel (%p723) target = $region64
        $region63: #{tpu_custom_call.1} parent=59 // pred_region
          %s726 = sand.u32 %s162, 1
          %s727 = scalar_lea.sflag [#allocation4], %s726
          %s728 = sand.u32 %s162, 1
          %s729 = smul.addr %s728, 8
          %s730 = scalar_lea.vmem [#allocation7], %s729
          %731 = dma.done %s727, 128
        $region64: #{tpu_custom_call.1} parent=59 // pred_fallthru
          _
      $region60: #{tpu_custom_call.1} parent=5 // pred_fallthru
        _
    $region6: #{tpu_custom_call.1} parent=1 // loop_footer
      %s21 = sadd.s32 1, %s17
    $region7: #{tpu_custom_call.1} parent=1 // loop_footer_branch
      %16 = sbr.rel target = $region3
    $region8: #{tpu_custom_call.1} parent=1 // loop_exit
      _
    %732 = vsyncpa [#allocation3], 1
    %s733 = scalar_lea.sflag [#allocation3], 1
    %734 = vsyncpa %s733, 1
    %735 = vsyncpa [#allocation6], 1
    %736 = vsyncpa [#allocation4], 1
    %s737 = scalar_lea.sflag [#allocation4], 1
    %738 = vsyncpa %s737, 1

</llo_original>
